<compile_context>
chip_gen: v6e
topology: v6e:2x2x1
jax: 0.10.0
libtpu: 0.0.40
codegen_flags: <defaults>
</compile_context>

<pallas_src>
import math

import jax
import jax.numpy as jnp
from jax.experimental import pallas as pl
from jax.experimental.pallas import tpu as pltpu

LATENT_DIM = 32
MIN_STD = 0.03

# rows of the coordinate-table input (padded to 8 sublanes)
_ROW_HC, _ROW_WC, _ROW_HC2, _ROW_WC2, _ROW_HCWC = 0, 1, 2, 3, 4
# columns of the per-batch coefficient input (padded to 8 lanes)
_COL_A, _COL_B, _COL_C, _COL_P, _COL_Q, _COL_F = 0, 1, 2, 3, 4, 5


# ----------------------------------------------------------------------------
# Pallas kernel: per-pixel Gaussian log-prob as a separable quadratic form
# ----------------------------------------------------------------------------
def _pred_point_kernel(coef_ref, tab_ref, o_ref):
    # coef_ref: (Bt, 8)   per-batch scalar coefficients [A, B, C, P, Q, F0, 0, 0]
    # tab_ref : (8, HWt)  flattened coord tables [hc, wc, hc^2, wc^2, hc*wc, 0...]
    # o_ref   : (Bt, HWt) lane-dense log-prob output block
    coef = coef_ref[...]
    tab = tab_ref[...]

    A = coef[:, _COL_A:_COL_A + 1]          # (Bt, 1)
    Bq = coef[:, _COL_B:_COL_B + 1]
    Cq = coef[:, _COL_C:_COL_C + 1]
    P = coef[:, _COL_P:_COL_P + 1]
    Q = coef[:, _COL_Q:_COL_Q + 1]
    F0 = coef[:, _COL_F:_COL_F + 1]

    hc = tab[_ROW_HC:_ROW_HC + 1, :]        # (1, HWt)
    wc = tab[_ROW_WC:_ROW_WC + 1, :]
    hc2 = tab[_ROW_HC2:_ROW_HC2 + 1, :]
    wc2 = tab[_ROW_WC2:_ROW_WC2 + 1, :]
    hcwc = tab[_ROW_HCWC:_ROW_HCWC + 1, :]

    # broadcast (Bt,1) x (1,HWt) -> (Bt,HWt); pure VPU multiply-adds, no divides
    o_ref[...] = (A * hc2 + Bq * wc2 + Cq * hcwc) + (P * hc + Q * wc + F0)


# ----------------------------------------------------------------------------
# Tile selection helpers (exact divisors only -> no padded/masked blocks)
# ----------------------------------------------------------------------------
def _pick_lane_tile(hw):
    """Largest lane-dense (multiple-of-128) tile dividing hw; >=2 tiles if possible."""
    if hw % 128 != 0:
        return hw  # must equal the full dim to satisfy the (8,128) rule
    cap = min(hw, 16384)
    limit = cap if hw > cap else (hw // 2 if hw >= 256 else hw)
    if limit < 128:
        return hw
    start = limit - (limit % 128)
    for cand in range(start, 127, -128):
        if hw % cand == 0:
            return cand
    return hw


def _pick_batch_tile(b):
    if b % 8 != 0:
        return b  # block sublane dim equals the full array dim
    for cand in (64, 48, 32, 24, 16, 8):
        if cand <= b and b % cand == 0:
            return cand
    return 8


# ----------------------------------------------------------------------------
# Wrapper: coefficient prep (plain JAX, B x 5 work) + pallas_call
# ----------------------------------------------------------------------------
def pred_point_pallas(goal_embed, w_point, b_point, im_shape, min_std=MIN_STD):
    """goal_embed: (B, 1, L); w_point: (L, 5); b_point: (5,) -> (B, H, W) log-probs."""
    B = goal_embed.shape[0]
    H, W = int(im_shape[0]), int(im_shape[1])
    HW = H * W

    ge = goal_embed[:, 0].astype(jnp.float32)               # (B, L)
    w = jnp.asarray(w_point, jnp.float32)
    b = jnp.asarray(b_point, jnp.float32)

    # Tiny Linear(latent->5) + softplus: hoisted out of the kernel.
    p = jnp.dot(ge, w, precision=jax.lax.Precision.HIGHEST) + b   # (B, 5)
    mu_h, mu_w = p[:, 0], p[:, 1]
    a = jax.nn.softplus(p[:, 2]) + min_std      # scale_tril[0, 0]
    bc = p[:, 3]                                # scale_tril[1, 0]
    c = jax.nn.softplus(p[:, 4]) + min_std      # scale_tril[1, 1]

    # MVN log-prob with L = [[a,0],[bc,c]]:
    #   z1 = (h-mu_h)/a ; z2 = ((w-mu_w) - bc*z1)/c
    #   logp = -0.5(z1^2+z2^2) - log a - log c - log(2*pi)
    # expanded into logp = A h^2 + Bq w^2 + Cq h w + P h + Q w + F0.
    inv_a = 1.0 / a                              # exact scalar reciprocals (off hot path)
    inv_c = 1.0 / c
    k = bc * inv_a * inv_c
    A = -0.5 * (inv_a * inv_a + k * k)
    Bq = -0.5 * inv_c * inv_c
    Cq = k * inv_c
    P = -2.0 * A * mu_h - Cq * mu_w
    Q = -2.0 * Bq * mu_w - Cq * mu_h
    F0 = (A * mu_h * mu_h + Bq * mu_w * mu_w + Cq * mu_h * mu_w
          - jnp.log(a) - jnp.log(c) - math.log(2.0 * math.pi))

    zero_b = jnp.zeros_like(A)
    coef = jnp.stack([A, Bq, Cq, P, Q, F0, zero_b, zero_b], axis=1)   # (B, 8)

    # Flattened coordinate tables (row-major H x W), resident in VMEM.
    hs = jnp.linspace(-1.0, 1.0, H, dtype=jnp.float32)
    ws = jnp.linspace(-1.0, 1.0, W, dtype=jnp.float32)
    hc = jnp.repeat(hs, W)                      # (HW,)
    wc = jnp.tile(ws, H)                        # (HW,)
    zero_t = jnp.zeros_like(hc)
    tab = jnp.stack([hc, wc, hc * hc, wc * wc, hc * wc,
                     zero_t, zero_t, zero_t], axis=0)                 # (8, HW)

    b_t = _pick_batch_tile(B)
    hw_t = _pick_lane_tile(HW)
    grid = (B // b_t, HW // hw_t)

    out_flat = pl.pallas_call(
        _pred_point_kernel,
        out_shape=jax.ShapeDtypeStruct((B, HW), jnp.float32),
        grid_spec=pltpu.PrefetchScalarGridSpec(
            num_scalar_prefetch=0,
            grid=grid,
            in_specs=[
                # per-batch coefficients: constant along the HW grid axis
                pl.BlockSpec((b_t, 8), lambda i, j: (i, 0)),
                # coord tables: constant along the batch grid axis
                pl.BlockSpec((8, hw_t), lambda i, j: (0, j)),
            ],
            out_specs=pl.BlockSpec((b_t, hw_t), lambda i, j: (i, j)),
        ),
        compiler_params=pltpu.CompilerParams(
            dimension_semantics=("parallel", "parallel"),
            vmem_limit_bytes=32 * 1024 * 1024,
        ),
    )(coef, tab)

    return out_flat.reshape(B, H, W)


# ----------------------------------------------------------------------------
# Placeholder for the _VisualFeatures embedder (plain-JAX glue)
# ----------------------------------------------------------------------------
def _placeholder_visual_features(images, context, w_img, w_ctx, b_e):
    # TODO(synk): _VisualFeatures lives elsewhere in hem.models and its
    # architecture is not given in this module; this deterministic plain-JAX
    # stand-in maps images[:, :1] + context -> a (B, 1, latent_dim) embedding.
    img0 = images[:, :1]                                  # (B, 1, C, H, W)
    f_img = jnp.mean(img0, axis=(3, 4))                   # (B, 1, C)
    f_ctx = jnp.mean(context, axis=(1, 3, 4))             # (B, C)
    goal = jnp.tanh(f_img @ w_img + (f_ctx @ w_ctx)[:, None, :] + b_e)
    return goal.astype(jnp.float32)                       # (B, 1, L)


def point_predictor_forward(images, context, params):
    goal_embed = _placeholder_visual_features(
        images, context, params["w_img"], params["w_ctx"], params["b_e"]
    )
    im_shape = images.shape[3:]                           # (H, W)
    return pred_point_pallas(
        goal_embed, params["w_point"], params["b_point"], im_shape
    ), goal_embed


# ----------------------------------------------------------------------------
# Pure-JAX reference of _pred_point for verification
# ----------------------------------------------------------------------------
def _reference_pred_point(goal_embed, w, b, im_shape, min_std=MIN_STD):
    p = jnp.dot(goal_embed[:, 0], w, precision=jax.lax.Precision.HIGHEST) + b
    mu = p[:, :2]
    a = jax.nn.softplus(p[:, 2]) + min_std
    bc = p[:, 3]
    c = jax.nn.softplus(p[:, 4]) + min_std
    H, W = im_shape
    hc, wc = jnp.meshgrid(
        jnp.linspace(-1.0, 1.0, H), jnp.linspace(-1.0, 1.0, W), indexing="ij"
    )
    d1 = hc[None] - mu[:, 0][:, None, None]
    d2 = wc[None] - mu[:, 1][:, None, None]
    z1 = d1 / a[:, None, None]
    z2 = (d2 - bc[:, None, None] * z1) / c[:, None, None]
    log_det = (jnp.log(a) + jnp.log(c))[:, None, None]
    return -0.5 * (z1 * z1 + z2 * z2) - log_det - jnp.log(2.0 * jnp.pi)


if __name__ == "__main__":
    key = jax.random.PRNGKey(0)
    k_img, k_ctx, k_wi, k_wc, k_wp, k_bp = jax.random.split(key, 6)

    B, T, C, H, W = 2, 3, 3, 16, 16
    images = jax.random.normal(k_img, (B, T, C, H, W), jnp.float32)
    context = jax.random.normal(k_ctx, (B, 2, C, H, W), jnp.float32)

    params = {
        "w_img": 0.5 * jax.random.normal(k_wi, (C, LATENT_DIM), jnp.float32),
        "w_ctx": 0.5 * jax.random.normal(k_wc, (C, LATENT_DIM), jnp.float32),
        "b_e": jnp.zeros((LATENT_DIM,), jnp.float32),
        "w_point": 0.3 * jax.random.normal(k_wp, (LATENT_DIM, 5), jnp.float32),
        "b_point": 0.1 * jax.random.normal(k_bp, (5,), jnp.float32),
    }

    out, goal_embed = point_predictor_forward(images, context, params)
    out = jax.block_until_ready(out)
    assert out.shape == (B, H, W), out.shape

    ref = _reference_pred_point(
        goal_embed, params["w_point"], params["b_point"], (H, W)
    )
    ref = jax.block_until_ready(ref)
    assert jnp.allclose(out, ref, atol=1e-4, rtol=1e-4), (
        float(jnp.max(jnp.abs(out - ref)))
    )

    print("KERNEL_OK")
</pallas_src>

<mosaic_0001>
module attributes {stable_mosaic.version = 11 : i64} {
  func.func @_pred_point_kernel(%arg0: i32, %arg1: i32, %arg2: memref<2x8xf32, #tpu.memory_space<vmem>>, %arg3: memref<8x128xf32, #tpu.memory_space<vmem>>, %arg4: memref<2x128xf32, #tpu.memory_space<vmem>>) attributes {dimension_semantics = [#tpu.dimension_semantics<parallel>, #tpu.dimension_semantics<parallel>], iteration_bounds = array<i64: 1, 2>, scalar_prefetch = 0 : i64, scratch_operands = 0 : i64, tpu.core_type = #tpu.core_type<tc>, window_params = [{transform_indices = @transform_0, window_bounds = array<i64: 2, 8>}, {transform_indices = @transform_1, window_bounds = array<i64: 8, 128>}, {transform_indices = @transform_2, window_bounds = array<i64: 2, 128>}]} {
    %c0 = arith.constant 0 : index
    %c0_0 = arith.constant 0 : index
    %0 = vector.load %arg2[%c0, %c0_0] : memref<2x8xf32, #tpu.memory_space<vmem>>, vector<2x8xf32>
    %c0_1 = arith.constant 0 : index
    %c0_2 = arith.constant 0 : index
    %1 = vector.load %arg3[%c0_1, %c0_2] : memref<8x128xf32, #tpu.memory_space<vmem>>, vector<8x128xf32>
    %2 = vector.extract_strided_slice %0 {offsets = [0, 0], sizes = [2, 1], strides = [1, 1]} : vector<2x8xf32> to vector<2x1xf32>
    %3 = vector.extract_strided_slice %0 {offsets = [0, 1], sizes = [2, 1], strides = [1, 1]} : vector<2x8xf32> to vector<2x1xf32>
    %4 = vector.extract_strided_slice %0 {offsets = [0, 2], sizes = [2, 1], strides = [1, 1]} : vector<2x8xf32> to vector<2x1xf32>
    %5 = vector.extract_strided_slice %0 {offsets = [0, 3], sizes = [2, 1], strides = [1, 1]} : vector<2x8xf32> to vector<2x1xf32>
    %6 = vector.extract_strided_slice %0 {offsets = [0, 4], sizes = [2, 1], strides = [1, 1]} : vector<2x8xf32> to vector<2x1xf32>
    %7 = vector.extract_strided_slice %0 {offsets = [0, 5], sizes = [2, 1], strides = [1, 1]} : vector<2x8xf32> to vector<2x1xf32>
    %8 = vector.extract_strided_slice %1 {offsets = [0, 0], sizes = [1, 128], strides = [1, 1]} : vector<8x128xf32> to vector<1x128xf32>
    %9 = vector.extract_strided_slice %1 {offsets = [1, 0], sizes = [1, 128], strides = [1, 1]} : vector<8x128xf32> to vector<1x128xf32>
    %10 = vector.extract_strided_slice %1 {offsets = [2, 0], sizes = [1, 128], strides = [1, 1]} : vector<8x128xf32> to vector<1x128xf32>
    %11 = vector.extract_strided_slice %1 {offsets = [3, 0], sizes = [1, 128], strides = [1, 1]} : vector<8x128xf32> to vector<1x128xf32>
    %12 = vector.extract_strided_slice %1 {offsets = [4, 0], sizes = [1, 128], strides = [1, 1]} : vector<8x128xf32> to vector<1x128xf32>
    %13 = vector.broadcast %2 : vector<2x1xf32> to vector<2x128xf32>
    %14 = vector.broadcast %10 : vector<1x128xf32> to vector<2x128xf32>
    %15 = arith.mulf %13, %14 : vector<2x128xf32>
    %16 = vector.broadcast %3 : vector<2x1xf32> to vector<2x128xf32>
    %17 = vector.broadcast %11 : vector<1x128xf32> to vector<2x128xf32>
    %18 = arith.mulf %16, %17 : vector<2x128xf32>
    %19 = arith.addf %15, %18 : vector<2x128xf32>
    %20 = vector.broadcast %4 : vector<2x1xf32> to vector<2x128xf32>
    %21 = vector.broadcast %12 : vector<1x128xf32> to vector<2x128xf32>
    %22 = arith.mulf %20, %21 : vector<2x128xf32>
    %23 = arith.addf %19, %22 : vector<2x128xf32>
    %24 = vector.broadcast %5 : vector<2x1xf32> to vector<2x128xf32>
    %25 = vector.broadcast %8 : vector<1x128xf32> to vector<2x128xf32>
    %26 = arith.mulf %24, %25 : vector<2x128xf32>
    %27 = vector.broadcast %6 : vector<2x1xf32> to vector<2x128xf32>
    %28 = vector.broadcast %9 : vector<1x128xf32> to vector<2x128xf32>
    %29 = arith.mulf %27, %28 : vector<2x128xf32>
    %30 = arith.addf %26, %29 : vector<2x128xf32>
    %31 = vector.broadcast %7 : vector<2x1xf32> to vector<2x128xf32>
    %32 = arith.addf %30, %31 : vector<2x128xf32>
    %33 = arith.addf %23, %32 : vector<2x128xf32>
    %c0_3 = arith.constant 0 : index
    %c0_4 = arith.constant 0 : index
    %34 = vector.load %arg4[%c0_3, %c0_4] : memref<2x128xf32, #tpu.memory_space<vmem>>, vector<2x128xf32>
    tpu.vector_store %arg4[%c0_3, %c0_4], %33 {strides = array<i32>} : memref<2x128xf32, #tpu.memory_space<vmem>>, vector<2x128xf32>,
    return
  }
  func.func @transform_0(%arg0: i32, %arg1: i32) -> (i32, i32) {
    %c0_i32 = arith.constant 0 : i32
    %c0_i32_0 = arith.constant 0 : i32
    return %arg0, %c0_i32 : i32, i32
  }
  func.func @transform_1(%arg0: i32, %arg1: i32) -> (i32, i32) {
    %c0_i32 = arith.constant 0 : i32
    %c0_i32_0 = arith.constant 0 : i32
    return %c0_i32, %arg1 : i32, i32
  }
  func.func @transform_2(%arg0: i32, %arg1: i32) -> (i32, i32) {
    %c0_i32 = arith.constant 0 : i32
    return %arg0, %arg1 : i32, i32
  }
}

</mosaic_0001>

<llo_original>
// kernel: tpu_custom_call.1
$region0: #{tpu_custom_call.1}
  #allocation0 [shape = 'u32[]', space=smem, size = 0x4, offset = 0x4, fixed_abs, tag = 'smem constant byte address 0x4 - core index']
  #allocation1 [shape = 'u32[144,128]{1,0:T(1,128)}', space=vmem, size = 0x12000, scoped, tag = 'internal scratch']
  %s0 = inlined_call_operand.hbm [shape: f32[2,8], index: 0, kind: input, shape index: {}]
  %s1 = inlined_call_operand.hbm [shape: f32[8,256], index: 1, kind: input, shape index: {}]
  %s2 = inlined_call_operand.hbm [shape: f32[2,256], index: 2, kind: output, shape index: {}]
  %s3 = sld [smem:[#allocation0]]
  $region49: #{tpu_custom_call.1} parent=0
    _
  %s5 = ssub.s32 1, %s3
  %s6 = scalar_select 0, %s5, %s3
  $region1: #{tpu_custom_call.1} parent=0
    #allocation2 [shape = 'u8[1024]{0}', space=vmem, size = 0x400, scoped, tag = 'input window, operand 0, single buffered']
    #allocation3 [shape = 's32[2]{0}', space=sflag, size = 0x8, scoped, tag = 'scoped memory for tpu_custom_call.1']
    #allocation4 [shape = 's32[2]{0}', space=sflag, size = 0x8, scoped, tag = 'scoped memory for tpu_custom_call.1']
    #allocation5 [shape = 'u8[8192]{0}', space=vmem, size = 0x2000, scoped, tag = 'input window, operand 1']
    #allocation6 [shape = 's32[2]{0}', space=sflag, size = 0x8, scoped, tag = 'scoped memory for tpu_custom_call.1']
    #allocation7 [shape = 'u8[2048]{0}', space=vmem, size = 0x800, scoped, tag = 'output window, operand 0']
    %7 = vsyncpa [#allocation3], 0
    %8 = vsyncpa [#allocation6], 0
    %s9 = scalar_lea.sflag [#allocation6], 1
    %10 = vsyncpa %s9, 0
    %11 = vsyncpa [#allocation4], 0
    %s12 = scalar_lea.sflag [#allocation4], 1
    %13 = vsyncpa %s12, 0
    loop: start=0, step=1, limit=4
    $region2: #{tpu_custom_call.1} parent=1 // loop_pre_header
      _
    $region3: #{tpu_custom_call.1} parent=1 // loop_header
      %s15 = sphi 0, %s19
      %p16 = scmp.ge.s32.totalorder %s15, 4
      %s22 = sphi 0, %s34
      %s23 = sphi 0, %s30
      %s24 = sphi 0, %s22
      %s25 = sphi 0, %s23
      %s26 = sphi 0, %s24
      %s27 = sphi 0, %s25
      %s37 = sphi 0, %s39
      %s40 = sphi 0, %s37
      %s41 = sphi 0, %s40
      %s57 = sphi 0, %s41
      %s63 = sphi 0, %s65
      %s66 = sphi 0, %s63
      %s67 = sphi 0, %s66
      %s83 = sphi 0, %s67
      %s91 = sphi 0, %s93
      %s94 = sphi 0, %s91
      %s95 = sphi 0, %s94
      %s111 = sphi 0, %s95
    $region4: #{tpu_custom_call.1} parent=1 // loop_header_branch
      %18 = sbr.rel (%p16) target = $region8
    $region5: #{tpu_custom_call.1} parent=1 // loop_body
      %s20 = ssub.s32 %s15, 1
      %s21 = ssub.s32 %s15, 2
      %s28 = sadd.s32 1, %s23
      %p29 = scmp.ge.s32.totalorder %s28, 2
      %s30 = scalar_select %p29, 0, %s28
      %s31 = sadd.s32 1, %s22
      %s32 = scalar_select %p29, %s31, %s22
      %p33 = scmp.ge.s32.totalorder %s32, 1
      %s34 = scalar_select %p33, 0, %s32
      %s35 = ssub.s32 %s22, %s34
      %p36 = scmp.eq.s32.totalorder %s35, 0
      %s38 = sadd.s32 %s37, 1
      %s39 = scalar_select %p36, %s37, %s38
      %p42 = pneg %p36
      %p43 = scmp.eq.s32.totalorder %s15, 1
      %p44 = por %p42, %p43
      %p45 = scmp.ne.s32.totalorder %s37, %s40
      %p46 = scmp.eq.s32.totalorder %s15, 0
      %p47 = por %p45, %p46
      %p48 = scmp.ne.s32.totalorder %s37, %s40
      %p49 = scmp.eq.s32.totalorder %s20, 1
      %p50 = por %p48, %p49
      %p51 = scmp.ne.s32.totalorder %s40, %s41
      %p52 = scmp.eq.s32.totalorder %s20, 0
      %p53 = por %p51, %p52
      %p54 = scmp.ne.s32.totalorder %s40, %s41
      %p55 = scmp.eq.s32.totalorder %s21, 1
      %p56 = por %p54, %p55
      %p58 = scmp.ne.s32.totalorder %s41, %s57
      %p59 = scmp.eq.s32.totalorder %s21, 0
      %p60 = por %p58, %p59
      %s61 = ssub.s32 %s23, %s30
      %p62 = scmp.eq.s32.totalorder %s61, 0
      %s64 = sadd.s32 %s63, 1
      %s65 = scalar_select %p62, %s63, %s64
      %p68 = pneg %p62
      %p69 = scmp.eq.s32.totalorder %s15, 1
      %p70 = por %p68, %p69
      %p71 = scmp.ne.s32.totalorder %s63, %s66
      %p72 = scmp.eq.s32.totalorder %s15, 0
      %p73 = por %p71, %p72
      %p74 = scmp.ne.s32.totalorder %s63, %s66
      %p75 = scmp.eq.s32.totalorder %s20, 1
      %p76 = por %p74, %p75
      %p77 = scmp.ne.s32.totalorder %s66, %s67
      %p78 = scmp.eq.s32.totalorder %s20, 0
      %p79 = por %p77, %p78
      %p80 = scmp.ne.s32.totalorder %s66, %s67
      %p81 = scmp.eq.s32.totalorder %s21, 1
      %p82 = por %p80, %p81
      %p84 = scmp.ne.s32.totalorder %s67, %s83
      %p85 = scmp.eq.s32.totalorder %s21, 0
      %p86 = por %p84, %p85
      %s87 = ssub.s32 %s22, %s34
      %s88 = ssub.s32 %s23, %s30
      %s89 = sor.u32 %s87, %s88
      %p90 = scmp.eq.s32.totalorder %s89, 0
      %s92 = sadd.s32 %s91, 1
      %s93 = scalar_select %p90, %s91, %s92
      %p96 = pneg %p90
      %p97 = scmp.eq.s32.totalorder %s15, 1
      %p98 = por %p96, %p97
      %p99 = scmp.ne.s32.totalorder %s91, %s94
      %p100 = scmp.eq.s32.totalorder %s15, 0
      %p101 = por %p99, %p100
      %p102 = scmp.ne.s32.totalorder %s91, %s94
      %p103 = scmp.eq.s32.totalorder %s20, 1
      %p104 = por %p102, %p103
      %p105 = scmp.ne.s32.totalorder %s94, %s95
      %p106 = scmp.eq.s32.totalorder %s20, 0
      %p107 = por %p105, %p106
      %p108 = scmp.ne.s32.totalorder %s94, %s95
      %p109 = scmp.eq.s32.totalorder %s21, 1
      %p110 = por %p108, %p109
      %p112 = scmp.ne.s32.totalorder %s95, %s111
      %p113 = scmp.eq.s32.totalorder %s21, 0
      %p114 = por %p112, %p113
      %p115 = scmp.le.s32.totalorder 1, %s15
      %p116 = scmp.lt.s32.totalorder %s15, 3
      %p117 = pnand %p115, %p116
      %p118 = pneg %p117
      // Predicated region
      $region9: #{tpu_custom_call.1} parent=5 // pred_check
        _
      $region10: #{tpu_custom_call.1} parent=5 // pred_check_branch
        %120 = sbr.rel (%p117) target = $region12
      $region11: #{tpu_custom_call.1} parent=5 // pred_region
        %s121 = ssub.s32 %s15, 1
        // Predicated region
        $region13: #{tpu_custom_call.1} parent=11 // pred_check
          %p122 = pneg %p53
        $region14: #{tpu_custom_call.1} parent=11 // pred_check_branch
          %124 = sbr.rel (%p122) target = $region16
        $region15: #{tpu_custom_call.1} parent=11 // pred_region
          %s126 = ssub.s32 32, 32
          %127 = vsyncadd [#allocation3], %s126
          %s128 = smul.addr %s24, 32
          %s129 = scalar_lea.hbm %s0, %s128
          %s131 = sshll.u32 [#allocation2], 4
          %s132 = int_to_ptr.vmem [resolvable:$true] %s131
          %134 = dma.hbm_to_vmem [thread:$0]  %s129, 32, %s132, [#allocation3]
        $region16: #{tpu_custom_call.1} parent=11 // pred_fallthru
          _
      $region12: #{tpu_custom_call.1} parent=5 // pred_fallthru
        _
      %p135 = scmp.lt.s32.totalorder %s15, 2
      // Predicated region
      $region17: #{tpu_custom_call.1} parent=5 // pred_check
        %p136 = pneg %p135
      $region18: #{tpu_custom_call.1} parent=5 // pred_check_branch
        %138 = sbr.rel (%p136) target = $region20
      $region19: #{tpu_custom_call.1} parent=5 // pred_region
        // Predicated region
        $region21: #{tpu_custom_call.1} parent=19 // pred_check
          %p139 = pneg %p73
        $region22: #{tpu_custom_call.1} parent=19 // pred_check_branch
          %141 = sbr.rel (%p139) target = $region24
        $region23: #{tpu_custom_call.1} parent=19 // pred_region
          %s142 = sand.u32 %s63, 1
          %s143 = scalar_lea.sflag [#allocation6], %s142
          %s144 = sand.u32 %s63, 1
          %s145 = smul.addr %s144, 8
          %s146 = scalar_lea.vmem [#allocation5], %s145
          %s148 = ssub.s32 128, 128
          %149 = vsyncadd %s143, %s148
          %s150 = smul.addr %s23, 128
          %s151 = scalar_lea.hbm %s1, %s150
          %s153 = sshll.u32 %s146, 4
          %s154 = int_to_ptr.vmem [resolvable:$true] %s153
          %156 = dma.hbm_to_vmem [thread:$0]  %s151, 128, %s154, %s143
        $region24: #{tpu_custom_call.1} parent=19 // pred_fallthru
          _
      $region20: #{tpu_custom_call.1} parent=5 // pred_fallthru
        _
      %p157 = scmp.le.s32.totalorder 1, %s15
      %p158 = scmp.lt.s32.totalorder %s15, 3
      %p159 = pnand %p157, %p158
      %p160 = pneg %p159
      // Predicated region
      $region25: #{tpu_custom_call.1} parent=5 // pred_check
        _
      $region26: #{tpu_custom_call.1} parent=5 // pred_check_branch
        %162 = sbr.rel (%p159) target = $region28
      $region27: #{tpu_custom_call.1} parent=5 // pred_region
        %s163 = ssub.s32 %s15, 1
        // Predicated region
        $region29: #{tpu_custom_call.1} parent=27 // pred_check
          %p164 = pneg %p53
        $region30: #{tpu_custom_call.1} parent=27 // pred_check_branch
          %166 = sbr.rel (%p164) target = $region32
        $region31: #{tpu_custom_call.1} parent=27 // pred_region
          %167 = dma.done [#allocation3], 32
        $region32: #{tpu_custom_call.1} parent=27 // pred_fallthru
          _
        %s168 = sand.u32 %s66, 1
        %s169 = scalar_lea.sflag [#allocation6], %s168
        %s170 = sand.u32 %s66, 1
        %s171 = smul.addr %s170, 8
        %s172 = scalar_lea.vmem [#allocation5], %s171
        // Predicated region
        $region33: #{tpu_custom_call.1} parent=27 // pred_check
          %p173 = pneg %p79
        $region34: #{tpu_custom_call.1} parent=27 // pred_check_branch
          %175 = sbr.rel (%p173) target = $region36
        $region35: #{tpu_custom_call.1} parent=27 // pred_region
          %176 = dma.done %s169, 128
        $region36: #{tpu_custom_call.1} parent=27 // pred_fallthru
          _
        %p177 = pneg %p53
        %p178 = pneg %p50
        %s179 = sand.u32 %s66, 1
        %s180 = scalar_lea.sflag [#allocation6], %s179
        %s181 = sand.u32 %s66, 1
        %s182 = smul.addr %s181, 8
        %s183 = scalar_lea.vmem [#allocation5], %s182
        %p184 = pneg %p79
        %p185 = pneg %p76
        %p186 = pneg %p107
        %p187 = pneg %p104
        %s188 = sand.u32 %s94, 1
        %s189 = scalar_lea.sflag [#allocation4], %s188
        %s190 = sand.u32 %s94, 1
        %s191 = smul.addr %s190, 2
        %s192 = scalar_lea.vmem [#allocation7], %s191
        %v193 = vld [vmem:[#allocation2] sm:$0x3]
        %v194 = vld [vmem:[%s172] sm:$0xff]
        %196 = vset.pattern.permute.xlu0 0
        %197 = vperm.xlu0 %196, %v193
        %v198 = vpop.permute.xlu0 %197
        %v200 = vlaneseq
        %v201 = vshrl.u32 %v200, 7
        %v202 = vsub.s32 2, %v201
        %v203 = vrot.slane %v194, %v202
        %v204 = vmul.f32 %v198, %v203
        %205 = vset.pattern.permute.xlu0 1
        %206 = vperm.xlu0 %205, %v193
        %v207 = vpop.permute.xlu0 %206
        %v209 = vlaneseq
        %v210 = vshrl.u32 %v209, 7
        %v211 = vsub.s32 3, %v210
        %v212 = vrot.slane %v194, %v211
        %v213 = vmul.f32 %v207, %v212
        %v214 = vadd.f32 %v204, %v213
        %215 = vset.pattern.permute.xlu0 2
        %216 = vperm.xlu0 %215, %v193
        %v217 = vpop.permute.xlu0 %216
        %v219 = vlaneseq
        %v220 = vshrl.u32 %v219, 7
        %v221 = vsub.s32 4, %v220
        %v222 = vrot.slane %v194, %v221
        %v223 = vmul.f32 %v217, %v222
        %v224 = vadd.f32 %v214, %v223
        %225 = vset.pattern.permute.xlu0 3
        %226 = vperm.xlu0 %225, %v193
        %v227 = vpop.permute.xlu0 %226
        %v229 = vlaneseq
        %v230 = vshrl.u32 %v229, 7
        %v231 = vsub.s32 0, %v230
        %v232 = vrot.slane %v194, %v231
        %v233 = vmul.f32 %v227, %v232
        %234 = vset.pattern.permute.xlu0 4
        %235 = vperm.xlu0 %234, %v193
        %v236 = vpop.permute.xlu0 %235
        %v238 = vlaneseq
        %v239 = vshrl.u32 %v238, 7
        %v240 = vsub.s32 1, %v239
        %v241 = vrot.slane %v194, %v240
        %v242 = vmul.f32 %v236, %v241
        %v243 = vadd.f32 %v233, %v242
        %244 = vset.pattern.permute.xlu0 5
        %245 = vperm.xlu0 %244, %v193
        %v246 = vpop.permute.xlu0 %245
        %v248 = vadd.f32 %v243, %v246
        %v249 = vadd.f32 %v224, %v248
        %250 = vst [vmem:[%s192] sm:$0x3] %v249
        %s251 = sand.u32 %s94, 1
        %s252 = scalar_lea.sflag [#allocation4], %s251
        %s253 = sand.u32 %s94, 1
        %s254 = smul.addr %s253, 2
        %s255 = scalar_lea.vmem [#allocation7], %s254
        // Predicated region
        $region37: #{tpu_custom_call.1} parent=27 // pred_check
          %p256 = pneg %p104
        $region38: #{tpu_custom_call.1} parent=27 // pred_check_branch
          %258 = sbr.rel (%p256) target = $region40
        $region39: #{tpu_custom_call.1} parent=27 // pred_region
          %s260 = ssub.s32 32, 32
          %261 = vsyncadd %s252, %s260
          %s262 = smul.addr %s24, 2
          %s263 = sadd.s32 %s25, %s262
          %s264 = smul.addr %s263, 32
          %s265 = scalar_lea.hbm %s2, %s264
          %s267 = sshll.u32 %s255, 4
          %s268 = int_to_ptr.vmem [resolvable:$true] %s267
          %270 = dma.vmem_to_hbm [thread:$0]  %s268, 32, %s265, %s252
        $region40: #{tpu_custom_call.1} parent=27 // pred_fallthru
          _
      $region28: #{tpu_custom_call.1} parent=5 // pred_fallthru
        _
      %p271 = scmp.le.s32.totalorder 2, %s15
      // Predicated region
      $region41: #{tpu_custom_call.1} parent=5 // pred_check
        %p272 = pneg %p271
      $region42: #{tpu_custom_call.1} parent=5 // pred_check_branch
        %274 = sbr.rel (%p272) target = $region44
      $region43: #{tpu_custom_call.1} parent=5 // pred_region
        %s275 = ssub.s32 %s15, 2
        // Predicated region
        $region45: #{tpu_custom_call.1} parent=43 // pred_check
          %p276 = pneg %p110
        $region46: #{tpu_custom_call.1} parent=43 // pred_check_branch
          %278 = sbr.rel (%p276) target = $region48
        $region47: #{tpu_custom_call.1} parent=43 // pred_region
          %s279 = sand.u32 %s95, 1
          %s280 = scalar_lea.sflag [#allocation4], %s279
          %s281 = sand.u32 %s95, 1
          %s282 = smul.addr %s281, 2
          %s283 = scalar_lea.vmem [#allocation7], %s282
          %284 = dma.done %s280, 32
        $region48: #{tpu_custom_call.1} parent=43 // pred_fallthru
          _
      $region44: #{tpu_custom_call.1} parent=5 // pred_fallthru
        _
    $region6: #{tpu_custom_call.1} parent=1 // loop_footer
      %s19 = sadd.s32 1, %s15
    $region7: #{tpu_custom_call.1} parent=1 // loop_footer_branch
      %14 = sbr.rel target = $region3
    $region8: #{tpu_custom_call.1} parent=1 // loop_exit
      _
    %285 = vsyncpa [#allocation3], 1
    %s286 = scalar_lea.sflag [#allocation3], 1
    %287 = vsyncpa %s286, 1
    %288 = vsyncpa [#allocation6], 1
    %s289 = scalar_lea.sflag [#allocation6], 1
    %290 = vsyncpa %s289, 1
    %291 = vsyncpa [#allocation4], 1
    %s292 = scalar_lea.sflag [#allocation4], 1
    %293 = vsyncpa %s292, 1

</llo_original>
